<compile_context>
chip_gen: v6e
topology: v6e:2x2x1
jax: 0.10.0
libtpu: 0.0.40
codegen_flags: <defaults>
</compile_context>

<pallas_src>
import jax
import jax.numpy as jnp
from jax.experimental import pallas as pl
from jax.experimental.pallas import tpu as pltpu

HIDDEN = 64
OUT = 2
LANE = 128          # TPU lane width; TM must be a multiple of this
TM_TARGET = 1024    # batch rows per grid step


def pinn_kernel(t_ref, w1_ref, b1_ref, w2_ref, b2_ref, w3_ref, b3_ref, o_ref):
    # t_ref: (1, TM). Activations are (features, batch): batch sits on the
    # 128-lane axis so every load/store is lane-dense.
    x = jnp.sin(t_ref[...])                                        # (1, TM)

    # in_layer (Linear(1,H)): rank-1 -> VPU broadcast FMA, no MXU push.
    h = w1_ref[...] * x + b1_ref[...]                              # (H,1)*(1,TM)+(H,1) -> (H,TM)

    # h1: Linear(H,H) + ReLU.  Dropout(0.2) is identity in eval mode.
    # TODO(synk): MC-dropout (enable_dropout) would need pltpu.prng_seed +
    # pltpu.stateful_bernoulli; eval-mode forward is the identity, so omitted.
    h = jnp.dot(w2_ref[...], h, preferred_element_type=jnp.float32) + b2_ref[...]
    h = jnp.maximum(h, 0.0)

    # out_layer: (OUT,H) @ (H,TM) + (OUT,1)
    o_ref[...] = (jnp.dot(w3_ref[...], h, preferred_element_type=jnp.float32)
                  + b3_ref[...]).astype(o_ref.dtype)


def _round_up(x, m):
    return ((x + m - 1) // m) * m


@jax.jit
def pinn_forward(t, w1, b1, w2, b2, w3, b3):
    """t: (N,) or (N,1) float32. Weights in PyTorch layout (out_f, in_f) / (out_f,)."""
    t = t.reshape(-1).astype(jnp.float32)
    n = t.shape[0]

    # Tile choice: as large as possible (amortize per-step overhead), multiple
    # of 128 (lane-dense blocks), grid >= 2 when there is enough work (v7x
    # megacore), single block for tiny batches (skip multi-step pipelining).
    if n <= LANE:
        n_pad = LANE
        tm = n_pad
    elif n <= 2 * TM_TARGET:
        n_pad = _round_up(n, 2 * LANE)
        tm = n_pad // 2                  # grid == 2
    else:
        tm = TM_TARGET
        n_pad = _round_up(n, tm)

    if n_pad != n:
        t = jnp.pad(t, (0, n_pad - n))
    t_row = t.reshape(1, n_pad)

    # Column-vector biases so they broadcast over the batch (lane) axis.
    b1c = b1.reshape(HIDDEN, 1)
    b2c = b2.reshape(HIDDEN, 1)
    b3c = b3.reshape(OUT, 1)

    grid = (n_pad // tm,)
    const = lambda shape: pl.BlockSpec(shape, lambda i: (0, 0))  # resident weights

    out_t = pl.pallas_call(
        pinn_kernel,
        out_shape=jax.ShapeDtypeStruct((OUT, n_pad), jnp.float32),
        grid_spec=pltpu.PrefetchScalarGridSpec(
            num_scalar_prefetch=0,
            grid=grid,
            in_specs=[
                pl.BlockSpec((1, tm), lambda i: (0, i)),   # t tile (lane-dense)
                const((HIDDEN, 1)),                        # W_in  (H,1)
                const((HIDDEN, 1)),                        # b_in  (H,1)
                const((HIDDEN, HIDDEN)),                   # W_h1  (H,H)
                const((HIDDEN, 1)),                        # b_h1  (H,1)
                const((OUT, HIDDEN)),                      # W_out (OUT,H)
                const((OUT, 1)),                           # b_out (OUT,1)
            ],
            out_specs=pl.BlockSpec((OUT, tm), lambda i: (0, i)),
        ),
        compiler_params=pltpu.CompilerParams(
            dimension_semantics=("parallel",)),
    )(t_row, w1, b1c, w2, b2c, w3, b3c)

    return out_t.T[:n]                    # (N, OUT); transpose is layout plumbing


def init_params(key, hidden=HIDDEN, out=OUT):
    """Deterministic PyTorch-style uniform(-1/sqrt(fan_in), +) init, PyTorch layout."""
    ks = jax.random.split(key, 6)

    def linear(kw, kb, fan_in, fan_out):
        bound = 1.0 / (fan_in ** 0.5)
        w = jax.random.uniform(kw, (fan_out, fan_in), jnp.float32, -bound, bound)
        b = jax.random.uniform(kb, (fan_out,), jnp.float32, -bound, bound)
        return w, b

    w1, b1 = linear(ks[0], ks[1], 1, hidden)
    w2, b2 = linear(ks[2], ks[3], hidden, hidden)
    w3, b3 = linear(ks[4], ks[5], hidden, out)
    return w1, b1, w2, b2, w3, b3


def reference_forward(t, w1, b1, w2, b2, w3, b3):
    t = t.reshape(-1, 1).astype(jnp.float32)
    x = jnp.sin(t)
    h = x @ w1.T + b1
    h = jnp.maximum(h @ w2.T + b2, 0.0)
    return h @ w3.T + b3


if __name__ == "__main__":
    key = jax.random.PRNGKey(0)
    kp, kt = jax.random.split(key)
    params = init_params(kp)

    # Exercise the single-block path (n=8) and the grid=2 path (n=200).
    for n in (8, 200):
        t = jax.random.uniform(jax.random.fold_in(kt, n), (n,), jnp.float32, -3.0, 3.0)
        out = pinn_forward(t, *params)
        jax.block_until_ready(out)

        ref = reference_forward(t, *params)
        assert out.shape == (n, OUT), out.shape
        err = float(jnp.max(jnp.abs(out - ref)))
        assert jnp.allclose(out, ref, atol=1e-4, rtol=1e-4), err

    print("KERNEL_OK")
</pallas_src>

<mosaic_0001>
module attributes {stable_mosaic.version = 11 : i64} {
  func.func @pinn_kernel(%arg0: i32, %arg1: memref<1x128xf32, #tpu.memory_space<vmem>>, %arg2: memref<64x1xf32, #tpu.memory_space<vmem>>, %arg3: memref<64x1xf32, #tpu.memory_space<vmem>>, %arg4: memref<64x64xf32, #tpu.memory_space<vmem>>, %arg5: memref<64x1xf32, #tpu.memory_space<vmem>>, %arg6: memref<2x64xf32, #tpu.memory_space<vmem>>, %arg7: memref<2x1xf32, #tpu.memory_space<vmem>>, %arg8: memref<2x128xf32, #tpu.memory_space<vmem>>) attributes {dimension_semantics = [#tpu.dimension_semantics<parallel>], iteration_bounds = array<i64: 1>, scalar_prefetch = 0 : i64, scratch_operands = 0 : i64, tpu.core_type = #tpu.core_type<tc>, window_params = [{transform_indices = @transform_0, window_bounds = array<i64: 1, 128>}, {pipeline_mode = #tpu.pipeline_mode<synchronous>, transform_indices = @transform_1, window_bounds = array<i64: 64, 1>}, {pipeline_mode = #tpu.pipeline_mode<synchronous>, transform_indices = @transform_2, window_bounds = array<i64: 64, 1>}, {pipeline_mode = #tpu.pipeline_mode<synchronous>, transform_indices = @transform_3, window_bounds = array<i64: 64, 64>}, {pipeline_mode = #tpu.pipeline_mode<synchronous>, transform_indices = @transform_4, window_bounds = array<i64: 64, 1>}, {pipeline_mode = #tpu.pipeline_mode<synchronous>, transform_indices = @transform_5, window_bounds = array<i64: 2, 64>}, {pipeline_mode = #tpu.pipeline_mode<synchronous>, transform_indices = @transform_6, window_bounds = array<i64: 2, 1>}, {transform_indices = @transform_7, window_bounds = array<i64: 2, 128>}]} {
    %c0 = arith.constant 0 : index
    %c0_0 = arith.constant 0 : index
    %0 = vector.load %arg1[%c0, %c0_0] : memref<1x128xf32, #tpu.memory_space<vmem>>, vector<1x128xf32>
    %1 = math.sin %0 : vector<1x128xf32>
    %c0_1 = arith.constant 0 : index
    %c0_2 = arith.constant 0 : index
    %2 = vector.load %arg2[%c0_1, %c0_2] : memref<64x1xf32, #tpu.memory_space<vmem>>, vector<64x1xf32>
    %3 = vector.broadcast %2 : vector<64x1xf32> to vector<64x128xf32>
    %4 = vector.broadcast %1 : vector<1x128xf32> to vector<64x128xf32>
    %5 = arith.mulf %3, %4 : vector<64x128xf32>
    %c0_3 = arith.constant 0 : index
    %c0_4 = arith.constant 0 : index
    %6 = vector.load %arg3[%c0_3, %c0_4] : memref<64x1xf32, #tpu.memory_space<vmem>>, vector<64x1xf32>
    %7 = vector.broadcast %6 : vector<64x1xf32> to vector<64x128xf32>
    %8 = arith.addf %5, %7 : vector<64x128xf32>
    %c0_5 = arith.constant 0 : index
    %c0_6 = arith.constant 0 : index
    %9 = vector.load %arg4[%c0_5, %c0_6] : memref<64x64xf32, #tpu.memory_space<vmem>>, vector<64x64xf32>
    %cst = arith.constant dense<0.000000e+00> : vector<64x128xf32>
    %10 = tpu.matmul %9, %8, %cst {dimension_numbers = #tpu.dot_dimension_numbers<[1], [0], [0], [1], [0, 0, 1, 1], [], []>} : vector<64x64xf32>, vector<64x128xf32>, vector<64x128xf32> -> vector<64x128xf32>
    %c0_7 = arith.constant 0 : index
    %c0_8 = arith.constant 0 : index
    %11 = vector.load %arg5[%c0_7, %c0_8] : memref<64x1xf32, #tpu.memory_space<vmem>>, vector<64x1xf32>
    %12 = vector.broadcast %11 : vector<64x1xf32> to vector<64x128xf32>
    %13 = arith.addf %10, %12 : vector<64x128xf32>
    %cst_9 = arith.constant 0.000000e+00 : f32
    %14 = vector.broadcast %cst_9 : f32 to vector<64x128xf32>
    %15 = arith.maximumf %13, %14 : vector<64x128xf32>
    %c0_10 = arith.constant 0 : index
    %c0_11 = arith.constant 0 : index
    %16 = vector.load %arg6[%c0_10, %c0_11] : memref<2x64xf32, #tpu.memory_space<vmem>>, vector<2x64xf32>
    %cst_12 = arith.constant dense<0.000000e+00> : vector<2x128xf32>
    %17 = tpu.matmul %16, %15, %cst_12 {dimension_numbers = #tpu.dot_dimension_numbers<[1], [0], [0], [1], [0, 0, 1, 1], [], []>} : vector<2x64xf32>, vector<64x128xf32>, vector<2x128xf32> -> vector<2x128xf32>
    %c0_13 = arith.constant 0 : index
    %c0_14 = arith.constant 0 : index
    %18 = vector.load %arg7[%c0_13, %c0_14] : memref<2x1xf32, #tpu.memory_space<vmem>>, vector<2x1xf32>
    %19 = vector.broadcast %18 : vector<2x1xf32> to vector<2x128xf32>
    %20 = arith.addf %17, %19 : vector<2x128xf32>
    %c0_15 = arith.constant 0 : index
    %c0_16 = arith.constant 0 : index
    %21 = vector.load %arg8[%c0_15, %c0_16] : memref<2x128xf32, #tpu.memory_space<vmem>>, vector<2x128xf32>
    tpu.vector_store %arg8[%c0_15, %c0_16], %20 {strides = array<i32>} : memref<2x128xf32, #tpu.memory_space<vmem>>, vector<2x128xf32>,
    return
  }
  func.func @transform_0(%arg0: i32) -> (i32, i32) {
    %c0_i32 = arith.constant 0 : i32
    %c0_i32_0 = arith.constant 0 : i32
    return %c0_i32, %arg0 : i32, i32
  }
  func.func @transform_1(%arg0: i32) -> (i32, i32) {
    %c0_i32 = arith.constant 0 : i32
    %c0_i32_0 = arith.constant 0 : i32
    %c0_i32_1 = arith.constant 0 : i32
    return %c0_i32, %c0_i32_0 : i32, i32
  }
  func.func @transform_2(%arg0: i32) -> (i32, i32) {
    %c0_i32 = arith.constant 0 : i32
    %c0_i32_0 = arith.constant 0 : i32
    %c0_i32_1 = arith.constant 0 : i32
    return %c0_i32, %c0_i32_0 : i32, i32
  }
  func.func @transform_3(%arg0: i32) -> (i32, i32) {
    %c0_i32 = arith.constant 0 : i32
    %c0_i32_0 = arith.constant 0 : i32
    %c0_i32_1 = arith.constant 0 : i32
    return %c0_i32, %c0_i32_0 : i32, i32
  }
  func.func @transform_4(%arg0: i32) -> (i32, i32) {
    %c0_i32 = arith.constant 0 : i32
    %c0_i32_0 = arith.constant 0 : i32
    %c0_i32_1 = arith.constant 0 : i32
    return %c0_i32, %c0_i32_0 : i32, i32
  }
  func.func @transform_5(%arg0: i32) -> (i32, i32) {
    %c0_i32 = arith.constant 0 : i32
    %c0_i32_0 = arith.constant 0 : i32
    %c0_i32_1 = arith.constant 0 : i32
    return %c0_i32, %c0_i32_0 : i32, i32
  }
  func.func @transform_6(%arg0: i32) -> (i32, i32) {
    %c0_i32 = arith.constant 0 : i32
    %c0_i32_0 = arith.constant 0 : i32
    %c0_i32_1 = arith.constant 0 : i32
    return %c0_i32, %c0_i32_0 : i32, i32
  }
  func.func @transform_7(%arg0: i32) -> (i32, i32) {
    %c0_i32 = arith.constant 0 : i32
    %c0_i32_0 = arith.constant 0 : i32
    return %c0_i32, %arg0 : i32, i32
  }
}

</mosaic_0001>

<llo_original>
// kernel: pinn_forward.1
$region0: #{pinn_forward.1}
  #allocation0 [shape = 'u32[]', space=smem, size = 0x4, offset = 0x4, fixed_abs, tag = 'smem constant byte address 0x4 - core index']
  #allocation1 [shape = 'u32[144,128]{1,0:T(1,128)}', space=vmem, size = 0x12000, scoped, tag = 'internal scratch']
  %s0 = inlined_call_operand.vmem [shape: f32[1,128], index: 0, kind: input, shape index: {}]
  %s1 = inlined_call_operand.vmem [shape: f32[64,1], index: 1, kind: input, shape index: {}]
  %s2 = inlined_call_operand.vmem [shape: f32[64,1], index: 2, kind: input, shape index: {}]
  %s3 = inlined_call_operand.vmem [shape: f32[64,64], index: 3, kind: input, shape index: {}]
  %s4 = inlined_call_operand.vmem [shape: f32[64,1], index: 4, kind: input, shape index: {}]
  %s5 = inlined_call_operand.vmem [shape: f32[2,64], index: 5, kind: input, shape index: {}]
  %s6 = inlined_call_operand.vmem [shape: f32[2,1], index: 6, kind: input, shape index: {}]
  %s7 = inlined_call_operand.hbm [shape: f32[2,128], index: 7, kind: output, shape index: {}]
  %s8 = sld [smem:[#allocation0]]
  $region38: #{pinn_forward.1} parent=0
    _
  %s10 = ssub.s32 1, %s8
  %s11 = scalar_select 0, %s10, %s8
  $region1: #{pinn_forward.1} parent=0
    #allocation2 [shape = 'u8[1024]{0}', space=vmem, size = 0x400, scoped, tag = 'output window, operand 0, single buffered']
    #allocation3 [shape = 's32[1]{0}', space=sflag, size = 0x4, scoped, tag = 'scoped memory for pinn_forward.1']
    %12 = vsyncpa [#allocation3], 0
    // Predicated region
    $region2: #{pinn_forward.1} parent=1 // pred_check
      _
    $region3: #{pinn_forward.1} parent=1 // pred_check_branch
      %14 = sbr.rel (0) target = $region5
    $region4: #{pinn_forward.1} parent=1 // pred_region
      _
    $region5: #{pinn_forward.1} parent=1 // pred_fallthru
      _
    // Predicated region
    $region6: #{pinn_forward.1} parent=1 // pred_check
      _
    $region7: #{pinn_forward.1} parent=1 // pred_check_branch
      %16 = sbr.rel (0) target = $region9
    $region8: #{pinn_forward.1} parent=1 // pred_region
      _
    $region9: #{pinn_forward.1} parent=1 // pred_fallthru
      _
    // Predicated region
    $region10: #{pinn_forward.1} parent=1 // pred_check
      _
    $region11: #{pinn_forward.1} parent=1 // pred_check_branch
      %18 = sbr.rel (0) target = $region13
    $region12: #{pinn_forward.1} parent=1 // pred_region
      _
    $region13: #{pinn_forward.1} parent=1 // pred_fallthru
      _
    // Predicated region
    $region14: #{pinn_forward.1} parent=1 // pred_check
      _
    $region15: #{pinn_forward.1} parent=1 // pred_check_branch
      %20 = sbr.rel (0) target = $region17
    $region16: #{pinn_forward.1} parent=1 // pred_region
      _
    $region17: #{pinn_forward.1} parent=1 // pred_fallthru
      _
    // Predicated region
    $region18: #{pinn_forward.1} parent=1 // pred_check
      _
    $region19: #{pinn_forward.1} parent=1 // pred_check_branch
      %22 = sbr.rel (0) target = $region21
    $region20: #{pinn_forward.1} parent=1 // pred_region
      _
    $region21: #{pinn_forward.1} parent=1 // pred_fallthru
      _
    // Predicated region
    $region22: #{pinn_forward.1} parent=1 // pred_check
      _
    $region23: #{pinn_forward.1} parent=1 // pred_check_branch
      %24 = sbr.rel (0) target = $region25
    $region24: #{pinn_forward.1} parent=1 // pred_region
      _
    $region25: #{pinn_forward.1} parent=1 // pred_fallthru
      _
    // Predicated region
    $region26: #{pinn_forward.1} parent=1 // pred_check
      _
    $region27: #{pinn_forward.1} parent=1 // pred_check_branch
      %26 = sbr.rel (0) target = $region29
    $region28: #{pinn_forward.1} parent=1 // pred_region
      _
    $region29: #{pinn_forward.1} parent=1 // pred_fallthru
      _
    %v27 = vld [vmem:[%s0] sm:$0x1]
    %v28 = vand.u32 2147483647, %v27
    %vm29 = vcmp.le.f32.partialorder %v28, 0.7853982
    %vm30 = vcmp.lt.s32.totalorder %v27, 0
    %v31 = vand.u32 %v27, 2139095040
    %v32 = vshrl.u32 %v31, 23
    %v33 = vsub.s32 %v32, 127
    %v34 = vand.u32 2147483647, %v27
    %v35 = vand.u32 %v34, 8388607
    %v36 = vor.u32 %v35, 8388608
    %v37 = vsub.s32 0, %v36
    %v38 = vadd.s32 %v33, 1
    %vm39 = vcmp.gt.s32.totalorder %v38, 0
    %v40 = vsel %vm39, %v38, 0
    %v41 = vshrl.u32 %v40, 5
    %v42 = vand.u32 %v40, 31
    %v43 = vsub.s32 32, %v42
    %v44 = vshrl.u32 683565275, %v43
    %v45 = vshll.u32 683565275, %v42
    %v46 = vshrl.u32 2475754826, %v43
    %v47 = vor.u32 %v45, %v46
    %v48 = vshll.u32 2475754826, %v42
    %v49 = vshrl.u32 2131351028, %v43
    %v50 = vor.u32 %v48, %v49
    %v51 = vshll.u32 2131351028, %v42
    %v52 = vshrl.u32 2102212464, %v43
    %v53 = vor.u32 %v51, %v52
    %v54 = vshll.u32 2102212464, %v42
    %v55 = vshrl.u32 920167782, %v43
    %v56 = vor.u32 %v54, %v55
    %v57 = vshll.u32 920167782, %v42
    %v58 = vshrl.u32 1326507024, %v43
    %v59 = vor.u32 %v57, %v58
    %vm60 = vcmp.lt.s32.totalorder %v41, 1
    %vm61 = vcmp.lt.s32.totalorder %v41, 2
    %vm62 = vcmp.lt.s32.totalorder %v41, 3
    %vm63 = vcmp.lt.s32.totalorder %v41, 4
    %v64 = vsel %vm60, %v44, %v47
    %v65 = vsel %vm63, %v53, 2102212464
    %v66 = vsel %vm62, %v50, %v65
    %v67 = vsel %vm61, %v64, %v66
    %v68 = vsel %vm60, %v47, %v50
    %v69 = vsel %vm63, %v56, 920167782
    %v70 = vsel %vm62, %v53, %v69
    %v71 = vsel %vm61, %v68, %v70
    %v72 = vsel %vm60, %v50, %v53
    %v73 = vsel %vm63, %v59, 1326507024
    %v74 = vsel %vm62, %v56, %v73
    %v75 = vsel %vm61, %v72, %v74
    %v76 = vshll.u32 %v36, 8
    %v77 = vmul.u32.u64.compose %v76, %v75
    %v78 = vextract.low.u32 %v77
    %v79 = vextract.high.u32 %v77
    %v80 = vmul.u32.u64.compose %v76, %v71
    %v81 = vextract.low.u32 %v80
    %v82 = vextract.high.u32 %v80
    %v83 = vmul.u32 %v76, %v67
    %v84 = vadd.s32 %v79, %v81
    %vm85 = vc.u32 %v79, %v81
    %v86 = vadd.s32 %v82, 1
    %v87 = vsel %vm85, %v86, %v82
    %v88 = vadd.s32 %v83, %v87
    %v89 = vadd.s32 %v88, 536870912
    %v90 = vshrl.u32 %v89, 30
    %v91 = vshll.u32 %v90, 30
    %v92 = vsub.s32 %v88, %v91
    %vm93 = vcmp.lt.s32.totalorder %v92, 0
    %v94 = vsub.s32 0, %v92
    %v95 = vsel %vm93, %v94, %v92
    %v96 = vclz %v95
    %v97 = vsub.s32 %v96, 2
    %vm98 = vcmp.gt.s32.totalorder 0, %v97
    %v99 = vsel %vm98, 0, %v97
    %v100 = vsub.s32 32, %v99
    %v101 = vshll.u32 %v92, %v99
    %v102 = vshrl.u32 %v84, %v100
    %v103 = vor.u32 %v101, %v102
    %v104 = vsub.s32 4294967266, %v99
    %v105 = vadd.s32 %v104, 127
    %v106 = vshll.u32 %v105, 23
    %v107 = vor.u32 4788187, %v106
    %v108 = vand.u32 2147483647, %v107
    %v110 = vcvt.s32.f32 %v103
    %v111 = vmul.f32 %v110, %v108
    %v112 = vxor.u32 %v111, 2147483648
    %v113 = vsel %vm30, %v112, %v111
    %v114 = vsub.s32 4, %v90
    %v115 = vsel %vm30, %v114, %v90
    %v116 = vsel %vm29, %v27, %v113
    %v117 = vsel %vm29, 0, %v115
    %v118 = vcosq.f32.pop %v116
    %v119 = vsinq.f32.pop %v116
    %vm120 = vweird.f32 %v27
    %v121 = vadd.s32 %v117, 3
    %v122 = vand.u32 %v121, 3
    %vm123 = vcmp.lt.s32.totalorder %v122, 2
    %vm124 = vcmp.eq.s32.totalorder %v122, 0
    %v125 = vxor.u32 %v119, 2147483648
    %v126 = vsel %vm124, %v118, %v125
    %vm127 = vcmp.eq.s32.totalorder %v122, 2
    %v128 = vxor.u32 %v118, 2147483648
    %v129 = vsel %vm127, %v128, %v119
    %v130 = vsel %vm123, %v126, %v129
    %v131 = vsel %vm120, nan, %v130
    %v132 = vld [vmem:[%s1] sm:$0xff]
    %v133 = vld [vmem:[%s1 + $0x8] sm:$0xff]
    %v134 = vld [vmem:[%s1 + $0x10] sm:$0xff]
    %v135 = vld [vmem:[%s1 + $0x18] sm:$0xff]
    %v136 = vld [vmem:[%s1 + $0x20] sm:$0xff]
    %v137 = vld [vmem:[%s1 + $0x28] sm:$0xff]
    %v138 = vld [vmem:[%s1 + $0x30] sm:$0xff]
    %v139 = vld [vmem:[%s1 + $0x38] sm:$0xff]
    %141 = vset.pattern.permute.xlu0 0
    %142 = vperm.xlu0 %141, %v132
    %v143 = vpop.permute.xlu0 %142
    %146 = vset.pattern.permute.xlu0 0
    %147 = vperm.xlu0 %146, %v133
    %v148 = vpop.permute.xlu0 %147
    %151 = vset.pattern.permute.xlu0 0
    %152 = vperm.xlu0 %151, %v134
    %v153 = vpop.permute.xlu0 %152
    %156 = vset.pattern.permute.xlu0 0
    %157 = vperm.xlu0 %156, %v135
    %v158 = vpop.permute.xlu0 %157
    %161 = vset.pattern.permute.xlu0 0
    %162 = vperm.xlu0 %161, %v136
    %v163 = vpop.permute.xlu0 %162
    %166 = vset.pattern.permute.xlu0 0
    %167 = vperm.xlu0 %166, %v137
    %v168 = vpop.permute.xlu0 %167
    %171 = vset.pattern.permute.xlu0 0
    %172 = vperm.xlu0 %171, %v138
    %v173 = vpop.permute.xlu0 %172
    %176 = vset.pattern.permute.xlu0 0
    %177 = vperm.xlu0 %176, %v139
    %v178 = vpop.permute.xlu0 %177
    %v181 = vlaneseq
    %v182 = vshrl.u32 %v181, 7
    %v183 = vsub.s32 0, %v182
    %v184 = vrot.slane %v131, %v183
    %v186 = vmul.f32 %v143, %v184
    %v187 = vmul.f32 %v148, %v184
    %v188 = vmul.f32 %v153, %v184
    %v189 = vmul.f32 %v158, %v184
    %v190 = vmul.f32 %v163, %v184
    %v191 = vmul.f32 %v168, %v184
    %v192 = vmul.f32 %v173, %v184
    %v193 = vmul.f32 %v178, %v184
    %v194 = vld [vmem:[%s2] sm:$0xff]
    %v195 = vld [vmem:[%s2 + $0x8] sm:$0xff]
    %v196 = vld [vmem:[%s2 + $0x10] sm:$0xff]
    %v197 = vld [vmem:[%s2 + $0x18] sm:$0xff]
    %v198 = vld [vmem:[%s2 + $0x20] sm:$0xff]
    %v199 = vld [vmem:[%s2 + $0x28] sm:$0xff]
    %v200 = vld [vmem:[%s2 + $0x30] sm:$0xff]
    %v201 = vld [vmem:[%s2 + $0x38] sm:$0xff]
    %203 = vset.pattern.permute.xlu0 0
    %204 = vperm.xlu0 %203, %v194
    %v205 = vpop.permute.xlu0 %204
    %208 = vset.pattern.permute.xlu0 0
    %209 = vperm.xlu0 %208, %v195
    %v210 = vpop.permute.xlu0 %209
    %213 = vset.pattern.permute.xlu0 0
    %214 = vperm.xlu0 %213, %v196
    %v215 = vpop.permute.xlu0 %214
    %218 = vset.pattern.permute.xlu0 0
    %219 = vperm.xlu0 %218, %v197
    %v220 = vpop.permute.xlu0 %219
    %223 = vset.pattern.permute.xlu0 0
    %224 = vperm.xlu0 %223, %v198
    %v225 = vpop.permute.xlu0 %224
    %228 = vset.pattern.permute.xlu0 0
    %229 = vperm.xlu0 %228, %v199
    %v230 = vpop.permute.xlu0 %229
    %233 = vset.pattern.permute.xlu0 0
    %234 = vperm.xlu0 %233, %v200
    %v235 = vpop.permute.xlu0 %234
    %238 = vset.pattern.permute.xlu0 0
    %239 = vperm.xlu0 %238, %v201
    %v240 = vpop.permute.xlu0 %239
    %v242 = vadd.f32 %v186, %v205
    %v243 = vadd.f32 %v187, %v210
    %v244 = vadd.f32 %v188, %v215
    %v245 = vadd.f32 %v189, %v220
    %v246 = vadd.f32 %v190, %v225
    %v247 = vadd.f32 %v191, %v230
    %v248 = vadd.f32 %v192, %v235
    %v249 = vadd.f32 %v193, %v240
    %v250 = vld [vmem:[%s3] sm:$0xff]
    %v251 = vld [vmem:[%s3 + $0x8] sm:$0xff]
    %v252 = vld [vmem:[%s3 + $0x10] sm:$0xff]
    %v253 = vld [vmem:[%s3 + $0x18] sm:$0xff]
    %v254 = vld [vmem:[%s3 + $0x20] sm:$0xff]
    %v255 = vld [vmem:[%s3 + $0x28] sm:$0xff]
    %v256 = vld [vmem:[%s3 + $0x30] sm:$0xff]
    %v257 = vld [vmem:[%s3 + $0x38] sm:$0xff]
    %v258 = vld [vmem:[%s4] sm:$0xff]
    %v259 = vld [vmem:[%s4 + $0x8] sm:$0xff]
    %v260 = vld [vmem:[%s4 + $0x10] sm:$0xff]
    %v261 = vld [vmem:[%s4 + $0x18] sm:$0xff]
    %v262 = vld [vmem:[%s4 + $0x20] sm:$0xff]
    %v263 = vld [vmem:[%s4 + $0x28] sm:$0xff]
    %v264 = vld [vmem:[%s4 + $0x30] sm:$0xff]
    %v265 = vld [vmem:[%s4 + $0x38] sm:$0xff]
    %267 = vset.pattern.permute.xlu0 0
    %268 = vperm.xlu0 %267, %v258
    %v269 = vpop.permute.xlu0 %268
    %272 = vset.pattern.permute.xlu0 0
    %273 = vperm.xlu0 %272, %v259
    %v274 = vpop.permute.xlu0 %273
    %277 = vset.pattern.permute.xlu0 0
    %278 = vperm.xlu0 %277, %v260
    %v279 = vpop.permute.xlu0 %278
    %282 = vset.pattern.permute.xlu0 0
    %283 = vperm.xlu0 %282, %v261
    %v284 = vpop.permute.xlu0 %283
    %287 = vset.pattern.permute.xlu0 0
    %288 = vperm.xlu0 %287, %v262
    %v289 = vpop.permute.xlu0 %288
    %292 = vset.pattern.permute.xlu0 0
    %293 = vperm.xlu0 %292, %v263
    %v294 = vpop.permute.xlu0 %293
    %297 = vset.pattern.permute.xlu0 0
    %298 = vperm.xlu0 %297, %v264
    %v299 = vpop.permute.xlu0 %298
    %302 = vset.pattern.permute.xlu0 0
    %303 = vperm.xlu0 %302, %v265
    %v304 = vpop.permute.xlu0 %303
    %vm306 = vcmask 523264
    %v308 = vsel %vm306, %v250, 0
    %v311 = vsel %vm306, %v251, 0
    %v314 = vsel %vm306, %v252, 0
    %v317 = vsel %vm306, %v253, 0
    %v320 = vsel %vm306, %v254, 0
    %v323 = vsel %vm306, %v255, 0
    %v326 = vsel %vm306, %v256, 0
    %v329 = vsel %vm306, %v257, 0
    %331 = vmatprep.subr.mxu0 0.0
    %332 = vmatpush1.msra.mxu0 0.0
    %333 = vmatprep.subr.mxu0 0.0
    %334 = vmatpush1.msra.mxu0 0.0
    %335 = vmatprep.subr.mxu0 0.0
    %336 = vmatpush1.msra.mxu0 0.0
    %337 = vmatprep.subr.mxu0 0.0
    %338 = vmatpush1.msra.mxu0 0.0
    %339 = vmatprep.subr.mxu0 0.0
    %340 = vmatpush1.msra.mxu0 0.0
    %341 = vmatprep.subr.mxu0 0.0
    %342 = vmatpush1.msra.mxu0 0.0
    %343 = vmatprep.subr.mxu0 0.0
    %344 = vmatpush1.msra.mxu0 0.0
    %345 = vmatprep.subr.mxu0 0.0
    %346 = vmatpush1.msra.mxu0 0.0
    %347 = vmatprep.subr.mxu0 0.0
    %348 = vmatpush1.msra.mxu0 %v249
    %349 = vmatprep.subr.mxu0 0.0
    %350 = vmatpush1.msra.mxu0 %v248
    %351 = vmatprep.subr.mxu0 0.0
    %352 = vmatpush1.msra.mxu0 %v247
    %353 = vmatprep.subr.mxu0 0.0
    %354 = vmatpush1.msra.mxu0 %v246
    %355 = vmatprep.subr.mxu0 0.0
    %356 = vmatpush1.msra.mxu0 %v245
    %357 = vmatprep.subr.mxu0 0.0
    %358 = vmatpush1.msra.mxu0 %v244
    %359 = vmatprep.subr.mxu0 0.0
    %360 = vmatpush1.msra.mxu0 %v243
    %361 = vmatprep.subr.mxu0 0.0
    %362 = vmatpush1.msra.mxu0 %v242
    %363 = vmatprep.subr.mxu0 0.0
    %364 = vmatpush2.msra.mxu0 0.0
    %365 = vmatprep.subr.mxu0 0.0
    %366 = vmatpush2.msra.mxu0 0.0
    %367 = vmatprep.subr.mxu0 0.0
    %368 = vmatpush2.msra.mxu0 0.0
    %369 = vmatprep.subr.mxu0 0.0
    %370 = vmatpush2.msra.mxu0 0.0
    %371 = vmatprep.subr.mxu0 0.0
    %372 = vmatpush2.msra.mxu0 0.0
    %373 = vmatprep.subr.mxu0 0.0
    %374 = vmatpush2.msra.mxu0 0.0
    %375 = vmatprep.subr.mxu0 0.0
    %376 = vmatpush2.msra.mxu0 0.0
    %377 = vmatprep.subr.mxu0 0.0
    %378 = vmatpush2.msra.mxu0 0.0
    %379 = vmatprep.subr.mxu0 0.0
    %380 = vmatpush2.msra.mxu0 0.0
    %381 = vmatprep.subr.mxu0 0.0
    %382 = vmatpush2.msra.mxu0 0.0
    %383 = vmatprep.subr.mxu0 0.0
    %384 = vmatpush2.msra.mxu0 0.0
    %385 = vmatprep.subr.mxu0 0.0
    %386 = vmatpush2.msra.mxu0 0.0
    %387 = vmatprep.subr.mxu0 0.0
    %388 = vmatpush2.msra.mxu0 0.0
    %389 = vmatprep.subr.mxu0 0.0
    %390 = vmatpush2.msra.mxu0 0.0
    %391 = vmatprep.subr.mxu0 0.0
    %392 = vmatpush2.msra.mxu0 0.0
    %393 = vmatprep.subr.mxu0 0.0
    %394 = vmatpush2.msra.mxu0 0.0
    %395 = vmatprep.mubr.f32.mxu0 0.0
    %396 = vmatmul.mubr.f32.gmra.mxu0 %v308
    %v397 = vpop.f32.mrf.mxu0
    %v398 = vadd.f32 %v269, %v397
    %v399 = vpop.f32.mrf.mxu0
    %400 = vmatprep.mubr.f32.mxu0 0.0
    %401 = vmatmul.mubr.f32.gmra.mxu0 %v311
    %v402 = vpop.f32.mrf.mxu0
    %v403 = vadd.f32 %v274, %v402
    %v404 = vpop.f32.mrf.mxu0
    %405 = vmatprep.mubr.f32.mxu0 0.0
    %406 = vmatmul.mubr.f32.gmra.mxu0 %v314
    %v407 = vpop.f32.mrf.mxu0
    %v408 = vadd.f32 %v279, %v407
    %v409 = vpop.f32.mrf.mxu0
    %410 = vmatprep.mubr.f32.mxu0 0.0
    %411 = vmatmul.mubr.f32.gmra.mxu0 %v317
    %v412 = vpop.f32.mrf.mxu0
    %v413 = vadd.f32 %v284, %v412
    %v414 = vpop.f32.mrf.mxu0
    %415 = vmatprep.mubr.f32.mxu0 0.0
    %416 = vmatmul.mubr.f32.gmra.mxu0 %v320
    %v417 = vpop.f32.mrf.mxu0
    %v418 = vadd.f32 %v289, %v417
    %v419 = vpop.f32.mrf.mxu0
    %420 = vmatprep.mubr.f32.mxu0 0.0
    %421 = vmatmul.mubr.f32.gmra.mxu0 %v323
    %v422 = vpop.f32.mrf.mxu0
    %v423 = vadd.f32 %v294, %v422
    %v424 = vpop.f32.mrf.mxu0
    %425 = vmatprep.mubr.f32.mxu0 0.0
    %426 = vmatmul.mubr.f32.gmra.mxu0 %v326
    %v427 = vpop.f32.mrf.mxu0
    %v428 = vadd.f32 %v299, %v427
    %v429 = vpop.f32.mrf.mxu0
    %430 = vmatprep.mubr.f32.mxu0 0.0
    %431 = vmatmul.mubr.f32.gmra.mxu0 %v329
    %v432 = vpop.f32.mrf.mxu0
    %v433 = vadd.f32 %v304, %v432
    %v434 = vpop.f32.mrf.mxu0
    %435 = vdwg.mxu0
    %v436 = vmax.f32 %v398, 0.0
    %v437 = vmax.f32 %v403, 0.0
    %v438 = vmax.f32 %v408, 0.0
    %v439 = vmax.f32 %v413, 0.0
    %v440 = vmax.f32 %v418, 0.0
    %v441 = vmax.f32 %v423, 0.0
    %v442 = vmax.f32 %v428, 0.0
    %v443 = vmax.f32 %v433, 0.0
    %v444 = vld [vmem:[%s5] sm:$0x3]
    %v445 = vld [vmem:[%s6] sm:$0x3]
    %447 = vset.pattern.permute.xlu0 0
    %448 = vperm.xlu0 %447, %v445
    %v449 = vpop.permute.xlu0 %448
    %v452 = vsel %vm306, %v444, 0
    %454 = vmatprep.subr.mxu0 0.0
    %455 = vmatpush1.msra.mxu0 0.0
    %456 = vmatprep.subr.mxu0 0.0
    %457 = vmatpush1.msra.mxu0 0.0
    %458 = vmatprep.subr.mxu0 0.0
    %459 = vmatpush1.msra.mxu0 0.0
    %460 = vmatprep.subr.mxu0 0.0
    %461 = vmatpush1.msra.mxu0 0.0
    %462 = vmatprep.subr.mxu0 0.0
    %463 = vmatpush1.msra.mxu0 0.0
    %464 = vmatprep.subr.mxu0 0.0
    %465 = vmatpush1.msra.mxu0 0.0
    %466 = vmatprep.subr.mxu0 0.0
    %467 = vmatpush1.msra.mxu0 0.0
    %468 = vmatprep.subr.mxu0 0.0
    %469 = vmatpush1.msra.mxu0 0.0
    %470 = vmatprep.subr.mxu0 0.0
    %471 = vmatpush1.msra.mxu0 %v443
    %472 = vmatprep.subr.mxu0 0.0
    %473 = vmatpush1.msra.mxu0 %v442
    %474 = vmatprep.subr.mxu0 0.0
    %475 = vmatpush1.msra.mxu0 %v441
    %476 = vmatprep.subr.mxu0 0.0
    %477 = vmatpush1.msra.mxu0 %v440
    %478 = vmatprep.subr.mxu0 0.0
    %479 = vmatpush1.msra.mxu0 %v439
    %480 = vmatprep.subr.mxu0 0.0
    %481 = vmatpush1.msra.mxu0 %v438
    %482 = vmatprep.subr.mxu0 0.0
    %483 = vmatpush1.msra.mxu0 %v437
    %484 = vmatprep.subr.mxu0 0.0
    %485 = vmatpush1.msra.mxu0 %v436
    %486 = vmatprep.subr.mxu0 0.0
    %487 = vmatpush2.msra.mxu0 0.0
    %488 = vmatprep.subr.mxu0 0.0
    %489 = vmatpush2.msra.mxu0 0.0
    %490 = vmatprep.subr.mxu0 0.0
    %491 = vmatpush2.msra.mxu0 0.0
    %492 = vmatprep.subr.mxu0 0.0
    %493 = vmatpush2.msra.mxu0 0.0
    %494 = vmatprep.subr.mxu0 0.0
    %495 = vmatpush2.msra.mxu0 0.0
    %496 = vmatprep.subr.mxu0 0.0
    %497 = vmatpush2.msra.mxu0 0.0
    %498 = vmatprep.subr.mxu0 0.0
    %499 = vmatpush2.msra.mxu0 0.0
    %500 = vmatprep.subr.mxu0 0.0
    %501 = vmatpush2.msra.mxu0 0.0
    %502 = vmatprep.subr.mxu0 0.0
    %503 = vmatpush2.msra.mxu0 0.0
    %504 = vmatprep.subr.mxu0 0.0
    %505 = vmatpush2.msra.mxu0 0.0
    %506 = vmatprep.subr.mxu0 0.0
    %507 = vmatpush2.msra.mxu0 0.0
    %508 = vmatprep.subr.mxu0 0.0
    %509 = vmatpush2.msra.mxu0 0.0
    %510 = vmatprep.subr.mxu0 0.0
    %511 = vmatpush2.msra.mxu0 0.0
    %512 = vmatprep.subr.mxu0 0.0
    %513 = vmatpush2.msra.mxu0 0.0
    %514 = vmatprep.subr.mxu0 0.0
    %515 = vmatpush2.msra.mxu0 0.0
    %516 = vmatprep.subr.mxu0 0.0
    %517 = vmatpush2.msra.mxu0 0.0
    %518 = vmatprep.mubr.f32.mxu0 0.0
    %519 = vmatmul.mubr.f32.gmra.mxu0 %v452
    %v520 = vpop.f32.mrf.mxu0
    %v521 = vadd.f32 %v449, %v520
    %v522 = vpop.f32.mrf.mxu0
    %523 = vdwg.mxu0
    %524 = vst [vmem:[#allocation2] sm:$0x3] %v521
    // Predicated region
    $region30: #{pinn_forward.1} parent=1 // pred_check
      _
    $region31: #{pinn_forward.1} parent=1 // pred_check_branch
      %526 = sbr.rel (0) target = $region33
    $region32: #{pinn_forward.1} parent=1 // pred_region
      %s528 = ssub.s32 32, 32
      %529 = vsyncadd [#allocation3], %s528
      %s531 = sshll.u32 [#allocation2], 4
      %s532 = int_to_ptr.vmem [resolvable:$true] %s531
      %534 = dma.vmem_to_hbm [thread:$0]  %s532, 32, %s7, [#allocation3]
    $region33: #{pinn_forward.1} parent=1 // pred_fallthru
      _
    // Predicated region
    $region34: #{pinn_forward.1} parent=1 // pred_check
      _
    $region35: #{pinn_forward.1} parent=1 // pred_check_branch
      %536 = sbr.rel (0) target = $region37
    $region36: #{pinn_forward.1} parent=1 // pred_region
      %537 = dma.done [#allocation3], 32
    $region37: #{pinn_forward.1} parent=1 // pred_fallthru
      _
    %538 = vsyncpa [#allocation3], 1

</llo_original>
